<compile_context>
chip_gen: v5e
topology: v5e:2x2
jax: 0.10.0
libtpu: 0.0.40
codegen_flags: <defaults>
</compile_context>

<pallas_src>
import functools

import numpy as np
import jax
import jax.numpy as jnp
from jax.experimental import pallas as pl
from jax.experimental.pallas import tpu as pltpu


LANE = 128          # TPU vreg lane width; output slab / wide weights use this.
MAX_TB = 2048       # batch-tile cap: ~3 MiB double-buffered, safe on v5e's 16 MiB.


def _round_up(a, m):
    return ((a + m - 1) // m) * m


def _cdiv(a, b):
    return (a + b - 1) // b


# -----------------------------------------------------------------------------
# Kernels
# -----------------------------------------------------------------------------
def _front_end(x_ref, od_ref, w1_ref, w2_ref, b12_ref, w3_ref, b3_ref):
    """Fused linear_base | spread_patterns | concat -> linear_finish -> leaky_relu.

    x @ W1' + od @ W2' places [x1 | x2] in one (TB, 2*H1) slab (the concat is the
    lane offset baked into W2'), then linear_finish maps it to 128 lanes with the
    real output in lanes [0, H2) and exact zeros elsewhere.
    """
    x12 = (jnp.dot(x_ref[...], w1_ref[...], preferred_element_type=jnp.float32)
           + jnp.dot(od_ref[...], w2_ref[...], preferred_element_type=jnp.float32)
           + b12_ref[...])
    h = jnp.dot(x12, w3_ref[...], preferred_element_type=jnp.float32) + b3_ref[...]
    # F.leaky_relu (negative_slope = 0.01); padded lanes stay exactly 0.
    return jnp.where(h > 0.0, h, 0.01 * h)


def actor_kernel_base(x_ref, od_ref, w1_ref, w2_ref, b12_ref, w3_ref, b3_ref,
                      out_ref):
    """softmax_flag=False: base output only (event_tagger skipped entirely)."""
    out_ref[...] = _front_end(x_ref, od_ref, w1_ref, w2_ref, b12_ref, w3_ref, b3_ref)


def actor_kernel_full(x_ref, od_ref, w1_ref, w2_ref, b12_ref, w3_ref, b3_ref,
                      w4_ref, b4_ref, out_ref, *, h2, e):
    """softmax_flag=True: packed output slab — base in lanes [0,h2), softmax in [h2,h2+e)."""
    base = _front_end(x_ref, od_ref, w1_ref, w2_ref, b12_ref, w3_ref, b3_ref)

    # event_tagger: W4' already routes its outputs to lanes [h2, h2+e).
    logits = jnp.dot(base, w4_ref[...], preferred_element_type=jnp.float32) + b4_ref[...]
    lane = jax.lax.broadcasted_iota(jnp.int32, logits.shape, dimension=1)
    valid = (lane >= h2) & (lane < h2 + e)
    logits = jnp.where(valid, logits, -1e30)

    z = logits - jnp.max(logits, axis=-1, keepdims=True)
    ex = jnp.exp(z)                                   # masked lanes underflow to 0
    inv = pl.reciprocal(jnp.sum(ex, axis=-1, keepdims=True), approx=True)  # EUP slot
    # base is zero in lanes >= h2; probs are zero outside [h2, h2+e) -> disjoint.
    out_ref[...] = base + ex * inv


# -----------------------------------------------------------------------------
# Host-side parameter packing (done once per parameter set)
# -----------------------------------------------------------------------------
def pack_params(params):
    """Pack the 4 Linear layers into minimal lane-dense f32 slabs.

    Returns (w1p, w2p, b12, w3p, b3p, w4p, b4p), H2, E.
      w1p (D_in, 2H1):  W1 in lanes [0,H1)
      w2p (D_dec, 2H1): W2 in lanes [H1,2H1)        (bakes in the torch.cat)
      w3p (2H1, 128):   W3 in lanes [0,H2)
      w4p (128, 128):   W4 in rows [0,H2), lanes [H2,H2+E)  (routes softmax lanes)
    """
    w1, b1, w2, b2, w3, b3, w4, b4 = params
    D_in, H1 = w1.shape
    D_dec = w2.shape[0]
    H2 = w3.shape[1]
    E = w4.shape[1]
    H12 = 2 * H1
    assert H12 <= LANE and H2 + E <= LANE

    w1p = jnp.zeros((D_in, H12), jnp.float32).at[:, :H1].set(w1)
    w2p = jnp.zeros((D_dec, H12), jnp.float32).at[:, H1:].set(w2)
    b12 = (jnp.zeros((1, H12), jnp.float32)
           .at[0, :H1].set(b1[0]).at[0, H1:].set(b2[0]))

    w3p = jnp.zeros((H12, LANE), jnp.float32).at[:, :H2].set(w3)
    b3p = jnp.zeros((1, LANE), jnp.float32).at[0, :H2].set(b3[0])

    w4p = jnp.zeros((LANE, LANE), jnp.float32).at[:H2, H2:H2 + E].set(w4)
    b4p = jnp.zeros((1, LANE), jnp.float32).at[0, H2:H2 + E].set(b4[0])

    return (w1p, w2p, b12, w3p, b3p, w4p, b4p), H2, E


# -----------------------------------------------------------------------------
# Batch tiling: big tiles (amortize ~0.35 us/step), but >= 2 steps when possible
# so both v7x TensorCores get work; cap at MAX_TB for v5e's scoped VMEM.
# -----------------------------------------------------------------------------
def _tile_batch(B):
    B8 = _round_up(max(B, 1), 8)
    if B8 <= 8:
        return B8, B8, 1                      # single tiny block: no-grid path
    nb = max(2, _cdiv(B8, MAX_TB))
    TB = _round_up(_cdiv(B8, nb), 8)
    B_pad = _round_up(B8, TB)
    return TB, B_pad, B_pad // TB


# -----------------------------------------------------------------------------
# Wrappers
# -----------------------------------------------------------------------------
def actor_forward_batched(x, old_decisions, params, softmax_flag=True):
    """x: (B, D_in), old_decisions: (B, D_dec).  Returns (base (B,H2), softmax (B,E) or None)."""
    x = jnp.asarray(x, jnp.float32)
    od = jnp.asarray(old_decisions, jnp.float32)
    B, D_in = x.shape
    _, D_dec = od.shape

    (w1p, w2p, b12, w3p, b3p, w4p, b4p), H2, E = pack_params(params)

    TB, B_pad, nb = _tile_batch(B)
    if B_pad != B:
        # Minimal row padding only (no 128-lane slab materialization).
        x = jnp.pad(x, ((0, B_pad - B), (0, 0)))
        od = jnp.pad(od, ((0, B_pad - B), (0, 0)))

    if softmax_flag:
        kern = functools.partial(actor_kernel_full, h2=H2, e=E)
        weights = (w1p, w2p, b12, w3p, b3p, w4p, b4p)
    else:
        kern = actor_kernel_base
        weights = (w1p, w2p, b12, w3p, b3p)

    out_shape = jax.ShapeDtypeStruct((B_pad, LANE), jnp.float32)

    if nb == 1:
        # Single tiny block: no grid, no pipelining, everything VMEM-resident.
        vmem = pl.BlockSpec(memory_space=pltpu.MemorySpace.VMEM)
        out = pl.pallas_call(
            kern,
            out_shape=out_shape,
            in_specs=tuple([vmem] * (2 + len(weights))),
            out_specs=vmem,
        )(x, od, *weights)
    else:
        # Batched: grid over batch tiles, weights stay resident (constant block index).
        in_specs = (
            pl.BlockSpec((TB, D_in), lambda i: (i, 0)),
            pl.BlockSpec((TB, D_dec), lambda i: (i, 0)),
        ) + tuple(pl.BlockSpec(w.shape, lambda i: (0, 0)) for w in weights)
        out = pl.pallas_call(
            kern,
            out_shape=out_shape,
            grid=(nb,),
            in_specs=in_specs,
            out_specs=pl.BlockSpec((TB, LANE), lambda i: (i, 0)),
            compiler_params=pltpu.CompilerParams(
                dimension_semantics=("parallel",)),
        )(x, od, *weights)

    base = out[:B, :H2]
    if not softmax_flag:
        return base, None
    return base, out[:B, H2:H2 + E]


def actor_forward(x, old_decisions, params, softmax_flag=True):
    """Un-batched module semantics: x (D_in,), old_decisions (D_dec,)."""
    base, ev = actor_forward_batched(x[None, :], old_decisions[None, :], params, softmax_flag)
    if ev is None:
        return base[0], None
    return base[0], ev[0]


# -----------------------------------------------------------------------------
# Deterministic parameter init (mimics nn.Linear uniform(-1/sqrt(fan_in), ...))
# -----------------------------------------------------------------------------
def init_params(key, D_in, D_dec, H1, H2, E):
    def linear(key, fan_in, fan_out):
        k1, k2 = jax.random.split(key)
        bound = 1.0 / np.sqrt(fan_in)
        w = jax.random.uniform(k1, (fan_in, fan_out), jnp.float32, -bound, bound)
        b = jax.random.uniform(k2, (1, fan_out), jnp.float32, -bound, bound)
        return w, b

    keys = jax.random.split(key, 4)
    w1, b1 = linear(keys[0], D_in, H1)          # linear_base
    w2, b2 = linear(keys[1], D_dec, H1)         # spread_patterns
    w3, b3 = linear(keys[2], 2 * H1, H2)        # linear_finish
    w4, b4 = linear(keys[3], H2, E)             # event_tagger
    return (w1, b1, w2, b2, w3, b3, w4, b4)


# -----------------------------------------------------------------------------
# Pure-JAX reference for correctness checks.
# -----------------------------------------------------------------------------
def actor_forward_ref(x, od, params):
    (w1, b1, w2, b2, w3, b3, w4, b4) = params
    x1 = x @ w1 + b1[0]
    x2 = od @ w2 + b2[0]
    combined = jnp.concatenate([x1, x2])
    h = combined @ w3 + b3[0]
    base = jnp.where(h > 0, h, 0.01 * h)
    logits = base @ w4 + b4[0]
    return base, jax.nn.softmax(logits)


if __name__ == "__main__":
    # Small config consistent with the module's constructor.
    hidden_size1 = 32
    hidden_size2 = 32
    embeddding_total_size = 4
    window_size = 8
    match_max_size = 7
    num_cols = 3
    num_events = 7

    D_in = window_size * embeddding_total_size                  # 32
    D_dec = (match_max_size + 1) * (num_cols + 1)               # 32
    E = num_events + 1                                          # 8

    key = jax.random.PRNGKey(0)
    k_in, k_dec, k_par, k_bin, k_bdec = jax.random.split(key, 5)

    params = init_params(k_par, D_in, D_dec, hidden_size1, hidden_size2, E)

    # --- single-sample path (module semantics: un-batched 1-D tensors) ---
    x = jax.random.normal(k_in, (D_in,), jnp.float32)
    old_decisions = jax.random.normal(k_dec, (D_dec,), jnp.float32)

    base_output, event_softmax = actor_forward(x, old_decisions, params, softmax_flag=True)
    jax.block_until_ready((base_output, event_softmax))

    base_ref, ev_ref = actor_forward_ref(x, old_decisions, params)
    assert base_output.shape == (hidden_size2,)
    assert event_softmax.shape == (E,)
    assert np.allclose(np.asarray(base_output), np.asarray(base_ref), rtol=1e-4, atol=1e-4)
    # approx reciprocal in the softmax -> slightly relaxed tolerance.
    assert np.allclose(np.asarray(event_softmax), np.asarray(ev_ref), rtol=2e-3, atol=2e-4)

    # softmax_flag=False: event_tagger + softmax are skipped inside the kernel.
    base_only, none_ev = actor_forward(x, old_decisions, params, softmax_flag=False)
    jax.block_until_ready(base_only)
    assert none_ev is None
    assert np.allclose(np.asarray(base_only), np.asarray(base_ref), rtol=1e-4, atol=1e-4)

    # --- batched path (grid over batch tiles, weights VMEM-resident) ---
    for B in (160, 45):   # aligned and unaligned batch sizes (both use nb >= 2)
        kb1, kb2 = jax.random.split(jax.random.fold_in(k_bin, B))
        xb = jax.random.normal(kb1, (B, D_in), jnp.float32)
        odb = jax.random.normal(kb2, (B, D_dec), jnp.float32)

        base_b, ev_b = actor_forward_batched(xb, odb, params, softmax_flag=True)
        jax.block_until_ready((base_b, ev_b))

        base_rb, ev_rb = jax.vmap(lambda a, b: actor_forward_ref(a, b, params))(xb, odb)
        assert base_b.shape == (B, hidden_size2)
        assert ev_b.shape == (B, E)
        assert np.allclose(np.asarray(base_b), np.asarray(base_rb), rtol=1e-4, atol=1e-4)
        assert np.allclose(np.asarray(ev_b), np.asarray(ev_rb), rtol=2e-3, atol=2e-4)

        base_b0, ev_none = actor_forward_batched(xb, odb, params, softmax_flag=False)
        jax.block_until_ready(base_b0)
        assert ev_none is None
        assert np.allclose(np.asarray(base_b0), np.asarray(base_rb), rtol=1e-4, atol=1e-4)

    print("KERNEL_OK")
</pallas_src>

<mosaic_0001>
module attributes {stable_mosaic.version = 11 : i64} {
  func.func @actor_kernel_full(%arg0: memref<8x32xf32, #tpu.memory_space<vmem>>, %arg1: memref<8x32xf32, #tpu.memory_space<vmem>>, %arg2: memref<32x64xf32, #tpu.memory_space<vmem>>, %arg3: memref<32x64xf32, #tpu.memory_space<vmem>>, %arg4: memref<1x64xf32, #tpu.memory_space<vmem>>, %arg5: memref<64x128xf32, #tpu.memory_space<vmem>>, %arg6: memref<1x128xf32, #tpu.memory_space<vmem>>, %arg7: memref<128x128xf32, #tpu.memory_space<vmem>>, %arg8: memref<1x128xf32, #tpu.memory_space<vmem>>, %arg9: memref<8x128xf32, #tpu.memory_space<vmem>>) attributes {dimension_semantics = [], scalar_prefetch = 0 : i64, scratch_operands = 0 : i64, tpu.core_type = #tpu.core_type<tc>} {
    %c0 = arith.constant 0 : index
    %c0_0 = arith.constant 0 : index
    %0 = vector.load %arg0[%c0, %c0_0] : memref<8x32xf32, #tpu.memory_space<vmem>>, vector<8x32xf32>
    %c0_1 = arith.constant 0 : index
    %c0_2 = arith.constant 0 : index
    %1 = vector.load %arg2[%c0_1, %c0_2] : memref<32x64xf32, #tpu.memory_space<vmem>>, vector<32x64xf32>
    %cst = arith.constant dense<0.000000e+00> : vector<8x64xf32>
    %2 = tpu.matmul %0, %1, %cst {dimension_numbers = #tpu.dot_dimension_numbers<[1], [0], [0], [1], [0, 0, 1, 1], [], []>} : vector<8x32xf32>, vector<32x64xf32>, vector<8x64xf32> -> vector<8x64xf32>
    %c0_3 = arith.constant 0 : index
    %c0_4 = arith.constant 0 : index
    %3 = vector.load %arg1[%c0_3, %c0_4] : memref<8x32xf32, #tpu.memory_space<vmem>>, vector<8x32xf32>
    %c0_5 = arith.constant 0 : index
    %c0_6 = arith.constant 0 : index
    %4 = vector.load %arg3[%c0_5, %c0_6] : memref<32x64xf32, #tpu.memory_space<vmem>>, vector<32x64xf32>
    %cst_7 = arith.constant dense<0.000000e+00> : vector<8x64xf32>
    %5 = tpu.matmul %3, %4, %cst_7 {dimension_numbers = #tpu.dot_dimension_numbers<[1], [0], [0], [1], [0, 0, 1, 1], [], []>} : vector<8x32xf32>, vector<32x64xf32>, vector<8x64xf32> -> vector<8x64xf32>
    %6 = arith.addf %2, %5 : vector<8x64xf32>
    %c0_8 = arith.constant 0 : index
    %c0_9 = arith.constant 0 : index
    %7 = vector.load %arg4[%c0_8, %c0_9] : memref<1x64xf32, #tpu.memory_space<vmem>>, vector<1x64xf32>
    %8 = vector.broadcast %7 : vector<1x64xf32> to vector<8x64xf32>
    %9 = arith.addf %6, %8 : vector<8x64xf32>
    %c0_10 = arith.constant 0 : index
    %c0_11 = arith.constant 0 : index
    %10 = vector.load %arg5[%c0_10, %c0_11] : memref<64x128xf32, #tpu.memory_space<vmem>>, vector<64x128xf32>
    %cst_12 = arith.constant dense<0.000000e+00> : vector<8x128xf32>
    %11 = tpu.matmul %9, %10, %cst_12 {dimension_numbers = #tpu.dot_dimension_numbers<[1], [0], [0], [1], [0, 0, 1, 1], [], []>} : vector<8x64xf32>, vector<64x128xf32>, vector<8x128xf32> -> vector<8x128xf32>
    %c0_13 = arith.constant 0 : index
    %c0_14 = arith.constant 0 : index
    %12 = vector.load %arg6[%c0_13, %c0_14] : memref<1x128xf32, #tpu.memory_space<vmem>>, vector<1x128xf32>
    %13 = vector.broadcast %12 : vector<1x128xf32> to vector<8x128xf32>
    %14 = arith.addf %11, %13 : vector<8x128xf32>
    %cst_15 = arith.constant 0.000000e+00 : f32
    %15 = vector.broadcast %cst_15 : f32 to vector<8x128xf32>
    %16 = arith.cmpf ogt, %14, %15 : vector<8x128xf32>
    %cst_16 = arith.constant 0.00999999977 : f32
    %17 = vector.broadcast %cst_16 : f32 to vector<8x128xf32>
    %18 = arith.mulf %17, %14 : vector<8x128xf32>
    %19 = arith.select %16, %14, %18 : vector<8x128xi1>, vector<8x128xf32>
    %c0_17 = arith.constant 0 : index
    %c0_18 = arith.constant 0 : index
    %20 = vector.load %arg7[%c0_17, %c0_18] : memref<128x128xf32, #tpu.memory_space<vmem>>, vector<128x128xf32>
    %cst_19 = arith.constant dense<0.000000e+00> : vector<8x128xf32>
    %21 = tpu.matmul %19, %20, %cst_19 {dimension_numbers = #tpu.dot_dimension_numbers<[1], [0], [0], [1], [0, 0, 1, 1], [], []>} : vector<8x128xf32>, vector<128x128xf32>, vector<8x128xf32> -> vector<8x128xf32>
    %c0_20 = arith.constant 0 : index
    %c0_21 = arith.constant 0 : index
    %22 = vector.load %arg8[%c0_20, %c0_21] : memref<1x128xf32, #tpu.memory_space<vmem>>, vector<1x128xf32>
    %23 = vector.broadcast %22 : vector<1x128xf32> to vector<8x128xf32>
    %24 = arith.addf %21, %23 : vector<8x128xf32>
    %25 = tpu.iota {dimensions = array<i32: 1>} : vector<8x128xi32>
    %c32_i32 = arith.constant 32 : i32
    %26 = vector.broadcast %c32_i32 : i32 to vector<8x128xi32>
    %27 = arith.cmpi sge, %25, %26 : vector<8x128xi32>
    %c40_i32 = arith.constant 40 : i32
    %28 = vector.broadcast %c40_i32 : i32 to vector<8x128xi32>
    %29 = arith.cmpi slt, %25, %28 : vector<8x128xi32>
    %30 = arith.andi %27, %29 : vector<8x128xi1>
    %cst_22 = arith.constant -1.000000e+30 : f32
    %31 = vector.broadcast %cst_22 : f32 to vector<8x128xf32>
    %32 = arith.select %30, %24, %31 : vector<8x128xi1>, vector<8x128xf32>
    %cst_23 = arith.constant dense<0xFF800000> : vector<8xf32>
    %33 = vector.multi_reduction <maximumf>, %32, %cst_23 [1] : vector<8x128xf32> to vector<8xf32>
    %34 = vector.shape_cast %33 : vector<8xf32> to vector<8x1xf32>
    %35 = vector.broadcast %34 : vector<8x1xf32> to vector<8x128xf32>
    %36 = arith.subf %32, %35 : vector<8x128xf32>
    %37 = math.exp %36 : vector<8x128xf32>
    %cst_24 = arith.constant dense<0.000000e+00> : vector<8xf32>
    %38 = vector.multi_reduction <add>, %37, %cst_24 [1] : vector<8x128xf32> to vector<8xf32>
    %39 = vector.shape_cast %38 : vector<8xf32> to vector<8x1xf32>
    %40 = tpu.reciprocal %39 {approx = true} : vector<8x1xf32> -> vector<8x1xf32>
    %41 = vector.broadcast %40 : vector<8x1xf32> to vector<8x128xf32>
    %42 = arith.mulf %37, %41 : vector<8x128xf32>
    %43 = arith.addf %19, %42 : vector<8x128xf32>
    %c0_25 = arith.constant 0 : index
    %c0_26 = arith.constant 0 : index
    %44 = vector.load %arg9[%c0_25, %c0_26] : memref<8x128xf32, #tpu.memory_space<vmem>>, vector<8x128xf32>
    tpu.vector_store %arg9[%c0_25, %c0_26], %43 {strides = array<i32>} : memref<8x128xf32, #tpu.memory_space<vmem>>, vector<8x128xf32>,
    return
  }
}

</mosaic_0001>

<llo_original>
// kernel: tpu_custom_call.1
$region0: #{tpu_custom_call.1}
  #allocation0 [shape = 'u32[]', space=smem, size = 0x4, offset = 0x4, fixed_abs, tag = 'smem constant byte address 0x4 - core index']
  #allocation1 [shape = 'u32[72,128]{1,0:T(1,128)}', space=vmem, size = 0x9000, scoped, tag = 'internal scratch']
  %s0 = inlined_call_operand.hbm [shape: f32[8,32], index: 0, kind: input, shape index: {}]
  %s1 = inlined_call_operand.hbm [shape: f32[8,32], index: 1, kind: input, shape index: {}]
  %s2 = inlined_call_operand.hbm [shape: f32[32,64], index: 2, kind: input, shape index: {}]
  %s3 = inlined_call_operand.hbm [shape: f32[32,64], index: 3, kind: input, shape index: {}]
  %s4 = inlined_call_operand.vmem [shape: f32[1,64], index: 4, kind: input, shape index: {}]
  %s5 = inlined_call_operand.hbm [shape: f32[64,128], index: 5, kind: input, shape index: {}]
  %s6 = inlined_call_operand.vmem [shape: f32[1,128], index: 6, kind: input, shape index: {}]
  %s7 = inlined_call_operand.hbm [shape: f32[128,128], index: 7, kind: input, shape index: {}]
  %s8 = inlined_call_operand.vmem [shape: f32[1,128], index: 8, kind: input, shape index: {}]
  %s9 = inlined_call_operand.hbm [shape: f32[8,128], index: 9, kind: output, shape index: {}]
  %s10 = sld [smem:[#allocation0]]
  $region70: #{tpu_custom_call.1} parent=0
    _
  %s12 = ssub.s32 1, %s10
  %s13 = scalar_select 0, %s12, %s10
  $region1: #{tpu_custom_call.1} parent=0
    #allocation2 [shape = 'u8[4096]{0}', space=vmem, size = 0x1000, scoped, tag = 'input window, operand 0, single buffered']
    #allocation3 [shape = 's32[1]{0}', space=sflag, size = 0x4, scoped, tag = 'scoped memory for tpu_custom_call.1']
    #allocation4 [shape = 's32[1]{0}', space=sflag, size = 0x4, scoped, tag = 'scoped memory for tpu_custom_call.1']
    #allocation5 [shape = 'u8[4096]{0}', space=vmem, size = 0x1000, scoped, tag = 'input window, operand 1, single buffered']
    #allocation6 [shape = 's32[1]{0}', space=sflag, size = 0x4, scoped, tag = 'scoped memory for tpu_custom_call.1']
    #allocation7 [shape = 'u8[16384]{0}', space=vmem, size = 0x4000, scoped, tag = 'input window, operand 2, single buffered']
    #allocation8 [shape = 'u8[16384]{0}', space=vmem, size = 0x4000, scoped, tag = 'input window, operand 3, single buffered']
    #allocation9 [shape = 's32[1]{0}', space=sflag, size = 0x4, scoped, tag = 'scoped memory for tpu_custom_call.1']
    #allocation10 [shape = 'u8[32768]{0}', space=vmem, size = 0x8000, scoped, tag = 'input window, operand 5, single buffered']
    #allocation11 [shape = 'u8[65536]{0}', space=vmem, size = 0x10000, scoped, tag = 'input window, operand 7, single buffered']
    #allocation12 [shape = 's32[1]{0}', space=sflag, size = 0x4, scoped, tag = 'scoped memory for tpu_custom_call.1']
    #allocation13 [shape = 'u8[4096]{0}', space=vmem, size = 0x1000, scoped, tag = 'output window, operand 0, single buffered']
    %14 = vsyncpa [#allocation3], 0
    %15 = vsyncpa [#allocation6], 0
    %16 = vsyncpa [#allocation9], 0
    %17 = vsyncpa [#allocation12], 0
    %18 = vsyncpa [#allocation4], 0
    // Predicated region
    $region2: #{tpu_custom_call.1} parent=1 // pred_check
      _
    $region3: #{tpu_custom_call.1} parent=1 // pred_check_branch
      %20 = sbr.rel (0) target = $region5
    $region4: #{tpu_custom_call.1} parent=1 // pred_region
      %22 = vsyncadd [#allocation3], 0
      %s24 = sshll.u32 %s0, 4
      %s25 = int_to_ptr.hbm [resolvable:$true] %s24
      %s26 = sshll.u32 [#allocation2], 4
      %s27 = int_to_ptr.vmem [resolvable:$true] %s26
      %29 = dma.hbm_to_vmem [thread:$0]  %s25, 128, %s27, [#allocation3]
    $region5: #{tpu_custom_call.1} parent=1 // pred_fallthru
      _
    // Predicated region
    $region6: #{tpu_custom_call.1} parent=1 // pred_check
      _
    $region7: #{tpu_custom_call.1} parent=1 // pred_check_branch
      %31 = sbr.rel (0) target = $region9
    $region8: #{tpu_custom_call.1} parent=1 // pred_region
      %33 = vsyncadd [#allocation6], 0
      %s35 = sshll.u32 %s1, 4
      %s36 = int_to_ptr.hbm [resolvable:$true] %s35
      %s37 = sshll.u32 [#allocation5], 4
      %s38 = int_to_ptr.vmem [resolvable:$true] %s37
      %40 = dma.hbm_to_vmem [thread:$0]  %s36, 128, %s38, [#allocation6]
    $region9: #{tpu_custom_call.1} parent=1 // pred_fallthru
      _
    // Predicated region
    $region10: #{tpu_custom_call.1} parent=1 // pred_check
      _
    $region11: #{tpu_custom_call.1} parent=1 // pred_check_branch
      %42 = sbr.rel (0) target = $region13
    $region12: #{tpu_custom_call.1} parent=1 // pred_region
      %44 = vsyncadd [#allocation6], 0
      %s45 = sshll.u32 %s2, 4
      %s46 = int_to_ptr.hbm [resolvable:$true] %s45
      %s47 = sshll.u32 [#allocation7], 4
      %s48 = int_to_ptr.vmem [resolvable:$true] %s47
      %53 = dma.hbm_to_vmem [thread:$0]  %s46, 512, %s48, [#allocation6], 128, 128, 8
    $region13: #{tpu_custom_call.1} parent=1 // pred_fallthru
      _
    // Predicated region
    $region14: #{tpu_custom_call.1} parent=1 // pred_check
      _
    $region15: #{tpu_custom_call.1} parent=1 // pred_check_branch
      %55 = sbr.rel (0) target = $region17
    $region16: #{tpu_custom_call.1} parent=1 // pred_region
      %57 = vsyncadd [#allocation9], 0
      %s58 = sshll.u32 %s3, 4
      %s59 = int_to_ptr.hbm [resolvable:$true] %s58
      %s60 = sshll.u32 [#allocation8], 4
      %s61 = int_to_ptr.vmem [resolvable:$true] %s60
      %66 = dma.hbm_to_vmem [thread:$0]  %s59, 512, %s61, [#allocation9], 128, 128, 8
    $region17: #{tpu_custom_call.1} parent=1 // pred_fallthru
      _
    // Predicated region
    $region18: #{tpu_custom_call.1} parent=1 // pred_check
      _
    $region19: #{tpu_custom_call.1} parent=1 // pred_check_branch
      %68 = sbr.rel (0) target = $region21
    $region20: #{tpu_custom_call.1} parent=1 // pred_region
      _
    $region21: #{tpu_custom_call.1} parent=1 // pred_fallthru
      _
    // Predicated region
    $region22: #{tpu_custom_call.1} parent=1 // pred_check
      _
    $region23: #{tpu_custom_call.1} parent=1 // pred_check_branch
      %70 = sbr.rel (0) target = $region25
    $region24: #{tpu_custom_call.1} parent=1 // pred_region
      %72 = vsyncadd [#allocation9], 0
      %s73 = sshll.u32 %s5, 4
      %s74 = int_to_ptr.hbm [resolvable:$true] %s73
      %s75 = sshll.u32 [#allocation10], 4
      %s76 = int_to_ptr.vmem [resolvable:$true] %s75
      %81 = dma.hbm_to_vmem [thread:$0]  %s74, 1024, %s76, [#allocation9], 128, 128, 8
    $region25: #{tpu_custom_call.1} parent=1 // pred_fallthru
      _
    // Predicated region
    $region26: #{tpu_custom_call.1} parent=1 // pred_check
      _
    $region27: #{tpu_custom_call.1} parent=1 // pred_check_branch
      %83 = sbr.rel (0) target = $region29
    $region28: #{tpu_custom_call.1} parent=1 // pred_region
      _
    $region29: #{tpu_custom_call.1} parent=1 // pred_fallthru
      _
    // Predicated region
    $region30: #{tpu_custom_call.1} parent=1 // pred_check
      _
    $region31: #{tpu_custom_call.1} parent=1 // pred_check_branch
      %85 = sbr.rel (0) target = $region33
    $region32: #{tpu_custom_call.1} parent=1 // pred_region
      %87 = vsyncadd [#allocation12], 0
      %s88 = sshll.u32 %s7, 4
      %s89 = int_to_ptr.hbm [resolvable:$true] %s88
      %s90 = sshll.u32 [#allocation11], 4
      %s91 = int_to_ptr.vmem [resolvable:$true] %s90
      %96 = dma.hbm_to_vmem [thread:$0]  %s89, 2048, %s91, [#allocation12], 128, 128, 8
    $region33: #{tpu_custom_call.1} parent=1 // pred_fallthru
      _
    // Predicated region
    $region34: #{tpu_custom_call.1} parent=1 // pred_check
      _
    $region35: #{tpu_custom_call.1} parent=1 // pred_check_branch
      %98 = sbr.rel (0) target = $region37
    $region36: #{tpu_custom_call.1} parent=1 // pred_region
      _
    $region37: #{tpu_custom_call.1} parent=1 // pred_fallthru
      _
    // Predicated region
    $region38: #{tpu_custom_call.1} parent=1 // pred_check
      _
    $region39: #{tpu_custom_call.1} parent=1 // pred_check_branch
      %100 = sbr.rel (0) target = $region41
    $region40: #{tpu_custom_call.1} parent=1 // pred_region
      %102 = dma.done [#allocation3], 128
    $region41: #{tpu_custom_call.1} parent=1 // pred_fallthru
      _
    // Predicated region
    $region42: #{tpu_custom_call.1} parent=1 // pred_check
      _
    $region43: #{tpu_custom_call.1} parent=1 // pred_check_branch
      %104 = sbr.rel (0) target = $region45
    $region44: #{tpu_custom_call.1} parent=1 // pred_region
      %106 = dma.done [#allocation6], 128
    $region45: #{tpu_custom_call.1} parent=1 // pred_fallthru
      _
    // Predicated region
    $region46: #{tpu_custom_call.1} parent=1 // pred_check
      _
    $region47: #{tpu_custom_call.1} parent=1 // pred_check_branch
      %108 = sbr.rel (0) target = $region49
    $region48: #{tpu_custom_call.1} parent=1 // pred_region
      %110 = dma.done [#allocation6], 512
    $region49: #{tpu_custom_call.1} parent=1 // pred_fallthru
      _
    // Predicated region
    $region50: #{tpu_custom_call.1} parent=1 // pred_check
      _
    $region51: #{tpu_custom_call.1} parent=1 // pred_check_branch
      %112 = sbr.rel (0) target = $region53
    $region52: #{tpu_custom_call.1} parent=1 // pred_region
      %114 = dma.done [#allocation9], 512
    $region53: #{tpu_custom_call.1} parent=1 // pred_fallthru
      _
    // Predicated region
    $region54: #{tpu_custom_call.1} parent=1 // pred_check
      _
    $region55: #{tpu_custom_call.1} parent=1 // pred_check_branch
      %116 = sbr.rel (0) target = $region57
    $region56: #{tpu_custom_call.1} parent=1 // pred_region
      %118 = dma.done [#allocation9], 1024
    $region57: #{tpu_custom_call.1} parent=1 // pred_fallthru
      _
    // Predicated region
    $region58: #{tpu_custom_call.1} parent=1 // pred_check
      _
    $region59: #{tpu_custom_call.1} parent=1 // pred_check_branch
      %120 = sbr.rel (0) target = $region61
    $region60: #{tpu_custom_call.1} parent=1 // pred_region
      %122 = dma.done [#allocation12], 2048
    $region61: #{tpu_custom_call.1} parent=1 // pred_fallthru
      _
    %v123 = vld [vmem:[#allocation2] sm:$0xff]
    %v124 = vld [vmem:[#allocation7] sm:$0xff]
    %v125 = vld [vmem:[#allocation7 + $0x8] sm:$0xff]
    %v126 = vld [vmem:[#allocation7 + $0x10] sm:$0xff]
    %v127 = vld [vmem:[#allocation7 + $0x18] sm:$0xff]
    %v128 = vld [vmem:[#allocation5] sm:$0xff]
    %v129 = vld [vmem:[#allocation8] sm:$0xff]
    %v130 = vld [vmem:[#allocation8 + $0x8] sm:$0xff]
    %v131 = vld [vmem:[#allocation8 + $0x10] sm:$0xff]
    %v132 = vld [vmem:[#allocation8 + $0x18] sm:$0xff]
    %vm133 = vcmask 261120
    %v135 = vsel %vm133, %v128, 0
    %137 = vmatpush.msra.mxu0 0.0
    %138 = vmatpush.msra.mxu0 0.0
    %139 = vmatpush.msra.mxu0 0.0
    %140 = vmatpush.msra.mxu0 0.0
    %141 = vmatpush.msra.mxu0 0.0
    %142 = vmatpush.msra.mxu0 0.0
    %143 = vmatpush.msra.mxu0 0.0
    %144 = vmatpush.msra.mxu0 0.0
    %145 = vmatpush.msra.mxu0 0.0
    %146 = vmatpush.msra.mxu0 0.0
    %147 = vmatpush.msra.mxu0 0.0
    %148 = vmatpush.msra.mxu0 0.0
    %149 = vmatpush.msra.mxu0 %v132
    %150 = vmatpush.msra.mxu0 %v131
    %151 = vmatpush.msra.mxu0 %v130
    %152 = vmatpush.msra.mxu0 %v129
    %153 = vmatmul.f32.gmra.mxu0 %v135
    %v154 = vpop.f32.mrf.mxu0
    %v155 = vadd.f32 0.0, %v154
    %156 = vdwg.mxu0
    %v158 = vsel %vm133, %v123, 0
    %160 = vmatpush.msra.mxu0 0.0
    %161 = vmatpush.msra.mxu0 0.0
    %162 = vmatpush.msra.mxu0 0.0
    %163 = vmatpush.msra.mxu0 0.0
    %164 = vmatpush.msra.mxu0 0.0
    %165 = vmatpush.msra.mxu0 0.0
    %166 = vmatpush.msra.mxu0 0.0
    %167 = vmatpush.msra.mxu0 0.0
    %168 = vmatpush.msra.mxu0 0.0
    %169 = vmatpush.msra.mxu0 0.0
    %170 = vmatpush.msra.mxu0 0.0
    %171 = vmatpush.msra.mxu0 0.0
    %172 = vmatpush.msra.mxu0 %v127
    %173 = vmatpush.msra.mxu0 %v126
    %174 = vmatpush.msra.mxu0 %v125
    %175 = vmatpush.msra.mxu0 %v124
    %176 = vmatmul.f32.gmra.mxu0 %v158
    %v177 = vpop.f32.mrf.mxu0
    %v178 = vadd.f32 %v155, %v177
    %179 = vdwg.mxu0
    %v180 = vld [vmem:[%s4] sm:$0x1]
    %v182 = vperm.slane %v180, 0
    %v184 = vadd.f32 %v178, %v182
    %v185 = vld [vmem:[#allocation10] sm:$0xff]
    %v186 = vld [vmem:[#allocation10 + $0x8] sm:$0xff]
    %v187 = vld [vmem:[#allocation10 + $0x10] sm:$0xff]
    %v188 = vld [vmem:[#allocation10 + $0x18] sm:$0xff]
    %v189 = vld [vmem:[#allocation10 + $0x20] sm:$0xff]
    %v190 = vld [vmem:[#allocation10 + $0x28] sm:$0xff]
    %v191 = vld [vmem:[#allocation10 + $0x30] sm:$0xff]
    %v192 = vld [vmem:[#allocation10 + $0x38] sm:$0xff]
    %v193 = vld [vmem:[%s6] sm:$0x1]
    %v195 = vperm.slane %v193, 0
    %vm197 = vcmask 523264
    %v199 = vsel %vm197, %v184, 0
    %201 = vmatpush.msra.mxu0 0.0
    %202 = vmatpush.msra.mxu0 0.0
    %203 = vmatpush.msra.mxu0 0.0
    %204 = vmatpush.msra.mxu0 0.0
    %205 = vmatpush.msra.mxu0 0.0
    %206 = vmatpush.msra.mxu0 0.0
    %207 = vmatpush.msra.mxu0 0.0
    %208 = vmatpush.msra.mxu0 0.0
    %209 = vmatpush.msra.mxu0 %v192
    %210 = vmatpush.msra.mxu0 %v191
    %211 = vmatpush.msra.mxu0 %v190
    %212 = vmatpush.msra.mxu0 %v189
    %213 = vmatpush.msra.mxu0 %v188
    %214 = vmatpush.msra.mxu0 %v187
    %215 = vmatpush.msra.mxu0 %v186
    %216 = vmatpush.msra.mxu0 %v185
    %217 = vmatmul.f32.gmra.mxu0 %v199
    %v218 = vpop.f32.mrf.mxu0
    %v219 = vadd.f32 %v195, %v218
    %220 = vdwg.mxu0
    %vm221 = vcmp.gt.f32.partialorder %v219, 0.0
    %v222 = vmul.f32 %v219, 0.01
    %v223 = vsel %vm221, %v219, %v222
    %v224 = vld [vmem:[#allocation11] sm:$0xff]
    %v225 = vld [vmem:[#allocation11 + $0x8] sm:$0xff]
    %v226 = vld [vmem:[#allocation11 + $0x10] sm:$0xff]
    %v227 = vld [vmem:[#allocation11 + $0x18] sm:$0xff]
    %v228 = vld [vmem:[#allocation11 + $0x20] sm:$0xff]
    %v229 = vld [vmem:[#allocation11 + $0x28] sm:$0xff]
    %v230 = vld [vmem:[#allocation11 + $0x30] sm:$0xff]
    %v231 = vld [vmem:[#allocation11 + $0x38] sm:$0xff]
    %v232 = vld [vmem:[#allocation11 + $0x40] sm:$0xff]
    %v233 = vld [vmem:[#allocation11 + $0x48] sm:$0xff]
    %v234 = vld [vmem:[#allocation11 + $0x50] sm:$0xff]
    %v235 = vld [vmem:[#allocation11 + $0x58] sm:$0xff]
    %v236 = vld [vmem:[#allocation11 + $0x60] sm:$0xff]
    %v237 = vld [vmem:[#allocation11 + $0x68] sm:$0xff]
    %v238 = vld [vmem:[#allocation11 + $0x70] sm:$0xff]
    %v239 = vld [vmem:[#allocation11 + $0x78] sm:$0xff]
    %v240 = vld [vmem:[%s8] sm:$0x1]
    %v242 = vperm.slane %v240, 0
    %244 = vmatpush.msra.mxu0 %v239
    %245 = vmatpush.msra.mxu0 %v238
    %246 = vmatpush.msra.mxu0 %v237
    %247 = vmatpush.msra.mxu0 %v236
    %248 = vmatpush.msra.mxu0 %v235
    %249 = vmatpush.msra.mxu0 %v234
    %250 = vmatpush.msra.mxu0 %v233
    %251 = vmatpush.msra.mxu0 %v232
    %252 = vmatpush.msra.mxu0 %v231
    %253 = vmatpush.msra.mxu0 %v230
    %254 = vmatpush.msra.mxu0 %v229
    %255 = vmatpush.msra.mxu0 %v228
    %256 = vmatpush.msra.mxu0 %v227
    %257 = vmatpush.msra.mxu0 %v226
    %258 = vmatpush.msra.mxu0 %v225
    %259 = vmatpush.msra.mxu0 %v224
    %260 = vmatmul.f32.gmra.mxu0 %v223
    %v261 = vpop.f32.mrf.mxu0
    %v262 = vadd.f32 %v242, %v261
    %263 = vdwg.mxu0
    %v264 = vlaneseq
    %v265 = vand.u32 %v264, 127
    %vm266 = vcmp.ge.s32.totalorder %v265, 32
    %vm267 = vcmp.lt.s32.totalorder %v265, 40
    %vm268 = vmand %vm266, %vm267
    %v269 = vsel %vm268, %v262, -1e+30
    %270 = vmax.xlane.f32.xlu0 %v269
    %v271 = vpop.xlane.xlu0 %270
    %v272 = vsub.f32 %v269, %v271
    %v273 = vmul.f32 %v272, 1.442695
    %v274 = vpow.pop %v273
    %275 = vadd.xlane.f32.xlu0 %v274
    %v276 = vpop.xlane.xlu0 %275
    %v277 = vrcp.pop %v276
    %v278 = vmul.f32 %v274, %v277
    %v279 = vadd.f32 %v223, %v278
    %280 = vst [vmem:[#allocation13] sm:$0xff] %v279
    // Predicated region
    $region62: #{tpu_custom_call.1} parent=1 // pred_check
      _
    $region63: #{tpu_custom_call.1} parent=1 // pred_check_branch
      %282 = sbr.rel (0) target = $region65
    $region64: #{tpu_custom_call.1} parent=1 // pred_region
      %284 = vsyncadd [#allocation4], 0
      %s286 = sshll.u32 [#allocation13], 4
      %s287 = int_to_ptr.vmem [resolvable:$true] %s286
      %s288 = sshll.u32 %s9, 4
      %s289 = int_to_ptr.hbm [resolvable:$true] %s288
      %291 = dma.vmem_to_hbm [thread:$0]  %s287, 128, %s289, [#allocation4]
    $region65: #{tpu_custom_call.1} parent=1 // pred_fallthru
      _
    // Predicated region
    $region66: #{tpu_custom_call.1} parent=1 // pred_check
      _
    $region67: #{tpu_custom_call.1} parent=1 // pred_check_branch
      %293 = sbr.rel (0) target = $region69
    $region68: #{tpu_custom_call.1} parent=1 // pred_region
      %295 = dma.done [#allocation4], 128
    $region69: #{tpu_custom_call.1} parent=1 // pred_fallthru
      _
    %296 = vsyncpa [#allocation3], 1
    %297 = vsyncpa [#allocation6], 1
    %298 = vsyncpa [#allocation9], 1
    %299 = vsyncpa [#allocation12], 1
    %300 = vsyncpa [#allocation4], 1

</llo_original>
